<compile_context>
chip_gen: v7x
topology: tpu7x:2x2x1
jax: 0.10.0
libtpu: 0.0.40
codegen_flags: <defaults>
</compile_context>

<pallas_src>
import functools

import jax
import jax.numpy as jnp
from jax.experimental import pallas as pl
from jax.experimental.pallas import tpu as pltpu

VALUE = 10.0  # self.value in the PyTorch module


def _rpn_loss_kernel(cls_ref, gcls_ref, reg_ref, greg_ref, out_ref, *, value):
    # out_ref is a per-core (8, 128) accumulator block (constant index along the
    # "arbitrary" grid axis); every element carries the same running partial sum.
    @pl.when(pl.program_id(1) == 0)
    def _():
        out_ref[...] = jnp.zeros_like(out_ref)

    gcls = gcls_ref[...]                                # (1, BN), {0, 1}

    # ---- SmoothL1 (beta=1.0, reduction='none'), gated by positive labels ----
    d = reg_ref[...] - greg_ref[...]                    # (4, BN)
    ad = jnp.abs(d)
    sl1 = jnp.where(ad < 1.0, 0.5 * d * d, ad - 0.5)    # (4, BN)
    reg_sum = jnp.sum(gcls * sl1)                       # gcls broadcast over sublanes

    # ---- BCE (PyTorch clamps log terms at -100) ----
    # Single-log form: exact for hard {0,1} labels; halves EUP (log) pressure.
    # TODO(synk): if soft labels are ever passed, use the two-log BCE form.
    p = jnp.where(gcls > 0.5, cls_ref[...], 1.0 - cls_ref[...])   # (1, BN)
    bce_sum = -jnp.sum(jnp.maximum(jnp.log(p), -100.0))

    # Raw (un-normalized) partial; the 1/N scaling is applied once in the wrapper.
    out_ref[...] += value * reg_sum + bce_sum


def rpn_loss(classifier, reg, ground_cls, ground_reg, *, block_n=2048):
    """classifier, ground_cls: (N,);  reg, ground_reg: (N, 4)."""
    n = classifier.shape[0]

    # Lane-block width: multiple of 128, adapted down for small N.
    bn = int(min(block_n, max(128, pl.next_power_of_2(n))))
    bn = max(128, (bn // 128) * 128)
    # Pad N so it splits evenly into 2 core-groups of bn-wide blocks.
    n_pad = int(pl.cdiv(n, 2 * bn)) * 2 * bn
    pad = n_pad - n

    # Padding values chosen so padded lanes contribute exactly 0:
    #   gcls=0, cls=0  ->  BCE term log(1-0)=0;  reg=greg=0 -> SmoothL1=0.
    cls_row = jnp.pad(classifier.astype(jnp.float32), (0, pad)).reshape(1, n_pad)
    gcls_row = jnp.pad(ground_cls.astype(jnp.float32), (0, pad)).reshape(1, n_pad)
    reg_t = jnp.pad(reg.astype(jnp.float32).T, ((0, 0), (0, pad)))        # (4, N_pad)
    greg_t = jnp.pad(ground_reg.astype(jnp.float32).T, ((0, 0), (0, pad)))  # (4, N_pad)

    nb_per_core = n_pad // (2 * bn)

    def col_map(c, i):
        return (0, c * nb_per_core + i)

    kernel = functools.partial(_rpn_loss_kernel, value=float(VALUE))

    partials = pl.pallas_call(
        kernel,
        out_shape=jax.ShapeDtypeStruct((16, 128), jnp.float32),
        grid=(2, nb_per_core),
        in_specs=[
            pl.BlockSpec((1, bn), col_map),   # classifier
            pl.BlockSpec((1, bn), col_map),   # ground_cls
            pl.BlockSpec((4, bn), col_map),   # reg (transposed)
            pl.BlockSpec((4, bn), col_map),   # ground_reg (transposed)
        ],
        # Per-core (8,128) accumulator block; full-vreg unmasked stores.
        out_specs=pl.BlockSpec((8, 128), lambda c, i: (c, 0)),
        compiler_params=pltpu.CompilerParams(
            dimension_semantics=("parallel", "arbitrary")),
    )(cls_row, gcls_row, reg_t, greg_t)

    # Combine the two core partials and apply the 1/N normalization once,
    # using the true (un-padded) N.
    return (partials[0, 0] + partials[8, 0]) / jnp.float32(n)


def _reference(classifier, reg, ground_cls, ground_reg):
    # Faithful to the PyTorch module (two-log BCE with -100 clamp).
    d = reg - ground_reg
    ad = jnp.abs(d)
    sl1 = jnp.where(ad < 1.0, 0.5 * d * d, ad - 0.5)
    ao = ground_cls[:, None] * sl1
    reg_loss = VALUE * jnp.sum(ao) / ao.shape[0]
    log_c = jnp.maximum(jnp.log(classifier), -100.0)
    log_1mc = jnp.maximum(jnp.log(1.0 - classifier), -100.0)
    class_loss = jnp.mean(-(ground_cls * log_c + (1.0 - ground_cls) * log_1mc))
    return reg_loss + class_loss


if __name__ == "__main__":
    key = jax.random.PRNGKey(0)

    def make_inputs(k, n):
        k1, k2, k3, k4 = jax.random.split(k, 4)
        classifier = jax.nn.sigmoid(jax.random.normal(k1, (n,), dtype=jnp.float32))
        reg = jax.random.normal(k2, (n, 4), dtype=jnp.float32)
        ground_reg = jax.random.normal(k3, (n, 4), dtype=jnp.float32)
        ground_cls = (jax.random.uniform(k4, (n,)) > 0.5).astype(jnp.float32)
        return classifier, reg, ground_cls, ground_reg

    ka, kb = jax.random.split(key)

    # Small case (N = 128 anchors).
    c, r, gc, gr = make_inputs(ka, 128)
    loss = jax.block_until_ready(rpn_loss(c, r, gc, gr))
    ref = _reference(c, r, gc, gr)
    assert jnp.allclose(loss, ref, rtol=1e-5, atol=1e-5), (loss, ref)

    # Non-multiple-of-128 case to exercise lane padding / true-N normalization.
    c, r, gc, gr = make_inputs(kb, 200)
    loss = jax.block_until_ready(rpn_loss(c, r, gc, gr))
    ref = _reference(c, r, gc, gr)
    assert jnp.allclose(loss, ref, rtol=1e-5, atol=1e-5), (loss, ref)

    print("KERNEL_OK")
</pallas_src>

<mosaic_0001>
module attributes {stable_mosaic.version = 11 : i64} {
  func.func @_rpn_loss_kernel(%arg0: i32, %arg1: i32, %arg2: memref<1x128xf32, #tpu.memory_space<vmem>>, %arg3: memref<1x128xf32, #tpu.memory_space<vmem>>, %arg4: memref<4x128xf32, #tpu.memory_space<vmem>>, %arg5: memref<4x128xf32, #tpu.memory_space<vmem>>, %arg6: memref<8x128xf32, #tpu.memory_space<vmem>>) attributes {dimension_semantics = [#tpu.dimension_semantics<parallel>, #tpu.dimension_semantics<arbitrary>], iteration_bounds = array<i64: 2, 1>, scalar_prefetch = 0 : i64, scratch_operands = 0 : i64, tpu.core_type = #tpu.core_type<tc>, window_params = [{transform_indices = @transform_0, window_bounds = array<i64: 1, 128>}, {transform_indices = @transform_1, window_bounds = array<i64: 1, 128>}, {transform_indices = @transform_2, window_bounds = array<i64: 4, 128>}, {transform_indices = @transform_3, window_bounds = array<i64: 4, 128>}, {transform_indices = @transform_4, window_bounds = array<i64: 8, 128>}]} {
    %c0_i32 = arith.constant 0 : i32
    %0 = arith.cmpi eq, %arg1, %c0_i32 : i32
    %1 = arith.extui %0 : i1 to i32
    %c0_i32_0 = arith.constant 0 : i32
    %2 = arith.cmpi ne, %1, %c0_i32_0 : i32
    scf.if %2 {
      %cst_23 = arith.constant 0.000000e+00 : f32
      %43 = vector.broadcast %cst_23 : f32 to vector<8x128xf32>
      %c0_24 = arith.constant 0 : index
      %c0_25 = arith.constant 0 : index
      %44 = vector.load %arg6[%c0_24, %c0_25] : memref<8x128xf32, #tpu.memory_space<vmem>>, vector<8x128xf32>
      tpu.vector_store %arg6[%c0_24, %c0_25], %43 {strides = array<i32>} : memref<8x128xf32, #tpu.memory_space<vmem>>, vector<8x128xf32>,
    } else {
    }
    %c0 = arith.constant 0 : index
    %c0_1 = arith.constant 0 : index
    %3 = vector.load %arg3[%c0, %c0_1] : memref<1x128xf32, #tpu.memory_space<vmem>>, vector<1x128xf32>
    %c0_2 = arith.constant 0 : index
    %c0_3 = arith.constant 0 : index
    %4 = vector.load %arg4[%c0_2, %c0_3] : memref<4x128xf32, #tpu.memory_space<vmem>>, vector<4x128xf32>
    %c0_4 = arith.constant 0 : index
    %c0_5 = arith.constant 0 : index
    %5 = vector.load %arg5[%c0_4, %c0_5] : memref<4x128xf32, #tpu.memory_space<vmem>>, vector<4x128xf32>
    %6 = arith.subf %4, %5 : vector<4x128xf32>
    %7 = math.absf %6 : vector<4x128xf32>
    %cst = arith.constant 1.000000e+00 : f32
    %8 = vector.broadcast %cst : f32 to vector<4x128xf32>
    %9 = arith.cmpf olt, %7, %8 : vector<4x128xf32>
    %cst_6 = arith.constant 5.000000e-01 : f32
    %10 = vector.broadcast %cst_6 : f32 to vector<4x128xf32>
    %11 = arith.mulf %10, %6 : vector<4x128xf32>
    %12 = arith.mulf %11, %6 : vector<4x128xf32>
    %cst_7 = arith.constant 5.000000e-01 : f32
    %13 = vector.broadcast %cst_7 : f32 to vector<4x128xf32>
    %14 = arith.subf %7, %13 : vector<4x128xf32>
    %15 = arith.select %9, %12, %14 : vector<4x128xi1>, vector<4x128xf32>
    %16 = vector.broadcast %3 : vector<1x128xf32> to vector<4x128xf32>
    %17 = arith.mulf %16, %15 : vector<4x128xf32>
    %18 = vector.shape_cast %17 : vector<4x128xf32> to vector<1x4x128xf32>
    %cst_8 = arith.constant dense<0.000000e+00> : vector<1xf32>
    %19 = vector.multi_reduction <add>, %18, %cst_8 [1, 2] : vector<1x4x128xf32> to vector<1xf32>
    %20 = vector.shape_cast %19 : vector<1xf32> to vector<1x1x1xf32>
    %21 = vector.extract %20[0, 0, 0] : f32 from vector<1x1x1xf32>
    %cst_9 = arith.constant 5.000000e-01 : f32
    %22 = vector.broadcast %cst_9 : f32 to vector<1x128xf32>
    %23 = arith.cmpf ogt, %3, %22 : vector<1x128xf32>
    %c0_10 = arith.constant 0 : index
    %c0_11 = arith.constant 0 : index
    %24 = vector.load %arg2[%c0_10, %c0_11] : memref<1x128xf32, #tpu.memory_space<vmem>>, vector<1x128xf32>
    %c0_12 = arith.constant 0 : index
    %c0_13 = arith.constant 0 : index
    %25 = vector.load %arg2[%c0_12, %c0_13] : memref<1x128xf32, #tpu.memory_space<vmem>>, vector<1x128xf32>
    %cst_14 = arith.constant 1.000000e+00 : f32
    %26 = vector.broadcast %cst_14 : f32 to vector<1x128xf32>
    %27 = arith.subf %26, %25 : vector<1x128xf32>
    %28 = arith.select %23, %24, %27 : vector<1x128xi1>, vector<1x128xf32>
    %29 = math.log %28 : vector<1x128xf32>
    %cst_15 = arith.constant -1.000000e+02 : f32
    %30 = vector.broadcast %cst_15 : f32 to vector<1x128xf32>
    %31 = arith.maximumf %29, %30 : vector<1x128xf32>
    %32 = vector.shape_cast %31 : vector<1x128xf32> to vector<1x1x128xf32>
    %cst_16 = arith.constant dense<0.000000e+00> : vector<1xf32>
    %33 = vector.multi_reduction <add>, %32, %cst_16 [1, 2] : vector<1x1x128xf32> to vector<1xf32>
    %34 = vector.shape_cast %33 : vector<1xf32> to vector<1x1x1xf32>
    %35 = vector.extract %34[0, 0, 0] : f32 from vector<1x1x1xf32>
    %cst_17 = arith.constant 0.000000e+00 : f32
    %36 = arith.subf %cst_17, %35 : f32
    %c0_18 = arith.constant 0 : index
    %c0_19 = arith.constant 0 : index
    %37 = vector.load %arg6[%c0_18, %c0_19] : memref<8x128xf32, #tpu.memory_space<vmem>>, vector<8x128xf32>
    %cst_20 = arith.constant 1.000000e+01 : f32
    %38 = arith.mulf %cst_20, %21 : f32
    %39 = arith.addf %38, %36 : f32
    %40 = vector.broadcast %39 : f32 to vector<8x128xf32>
    %41 = arith.addf %37, %40 : vector<8x128xf32>
    %c0_21 = arith.constant 0 : index
    %c0_22 = arith.constant 0 : index
    %42 = vector.load %arg6[%c0_21, %c0_22] : memref<8x128xf32, #tpu.memory_space<vmem>>, vector<8x128xf32>
    tpu.vector_store %arg6[%c0_21, %c0_22], %41 {strides = array<i32>} : memref<8x128xf32, #tpu.memory_space<vmem>>, vector<8x128xf32>,
    return
  }
  func.func @transform_0(%arg0: i32, %arg1: i32) -> (i32, i32) {
    %c1_i32 = arith.constant 1 : i32
    %0 = arith.muli %arg0, %c1_i32 : i32
    %1 = arith.addi %0, %arg1 : i32
    %c0_i32 = arith.constant 0 : i32
    %c0_i32_0 = arith.constant 0 : i32
    return %c0_i32, %1 : i32, i32
  }
  func.func @transform_1(%arg0: i32, %arg1: i32) -> (i32, i32) {
    %c1_i32 = arith.constant 1 : i32
    %0 = arith.muli %arg0, %c1_i32 : i32
    %1 = arith.addi %0, %arg1 : i32
    %c0_i32 = arith.constant 0 : i32
    %c0_i32_0 = arith.constant 0 : i32
    return %c0_i32, %1 : i32, i32
  }
  func.func @transform_2(%arg0: i32, %arg1: i32) -> (i32, i32) {
    %c1_i32 = arith.constant 1 : i32
    %0 = arith.muli %arg0, %c1_i32 : i32
    %1 = arith.addi %0, %arg1 : i32
    %c0_i32 = arith.constant 0 : i32
    %c0_i32_0 = arith.constant 0 : i32
    return %c0_i32, %1 : i32, i32
  }
  func.func @transform_3(%arg0: i32, %arg1: i32) -> (i32, i32) {
    %c1_i32 = arith.constant 1 : i32
    %0 = arith.muli %arg0, %c1_i32 : i32
    %1 = arith.addi %0, %arg1 : i32
    %c0_i32 = arith.constant 0 : i32
    %c0_i32_0 = arith.constant 0 : i32
    return %c0_i32, %1 : i32, i32
  }
  func.func @transform_4(%arg0: i32, %arg1: i32) -> (i32, i32) {
    %c0_i32 = arith.constant 0 : i32
    %c0_i32_0 = arith.constant 0 : i32
    return %arg0, %c0_i32 : i32, i32
  }
}

</mosaic_0001>

<llo_original>
// kernel: tpu_custom_call.1
$region0: #{tpu_custom_call.1}
  #allocation0 [shape = 'u32[]', space=smem, size = 0x4, offset = 0x4, fixed_abs, tag = 'smem constant byte address 0x4 - core index']
  #allocation1 [shape = 'u32[144,128]{1,0:T(1,128)}', space=vmem, size = 0x12000, scoped, tag = 'internal scratch']
  %s0 = inlined_call_operand.hbm [shape: f32[1,256], index: 0, kind: input, shape index: {}]
  %s1 = inlined_call_operand.vmem [shape: f32[1,256], index: 1, kind: input, shape index: {}]
  %s2 = inlined_call_operand.hbm [shape: f32[4,256], index: 2, kind: input, shape index: {}]
  %s3 = inlined_call_operand.vmem [shape: f32[4,256], index: 3, kind: input, shape index: {}]
  %s4 = inlined_call_operand.hbm [shape: f32[16,128], index: 4, kind: output, shape index: {}]
  %s5 = sld [smem:[#allocation0]]
  $region61: #{tpu_custom_call.1} parent=0
    _
  %s7 = ssub.s32 1, %s5
  %s8 = scalar_select 0, %s7, %s5
  $region1: #{tpu_custom_call.1} parent=0
    #allocation2 [shape = 'u8[1024]{0}', space=vmem, size = 0x400, scoped, tag = 'input window, operand 0']
    #allocation3 [shape = 's32[2]{0}', space=sflag, size = 0x8, scoped, tag = 'scoped memory for tpu_custom_call.1']
    #allocation4 [shape = 's32[2]{0}', space=sflag, size = 0x8, scoped, tag = 'scoped memory for tpu_custom_call.1']
    #allocation5 [shape = 'u8[4096]{0}', space=vmem, size = 0x1000, scoped, tag = 'input window, operand 2']
    #allocation6 [shape = 's32[2]{0}', space=sflag, size = 0x8, scoped, tag = 'scoped memory for tpu_custom_call.1']
    #allocation7 [shape = 'u8[8192]{0}', space=vmem, size = 0x2000, scoped, tag = 'output window, operand 0']
    %9 = vsyncpa [#allocation3], 0
    %s10 = scalar_lea.sflag [#allocation3], 1
    %11 = vsyncpa %s10, 0
    %12 = vsyncpa [#allocation6], 0
    %s13 = scalar_lea.sflag [#allocation6], 1
    %14 = vsyncpa %s13, 0
    %15 = vsyncpa [#allocation4], 0
    %s16 = scalar_lea.sflag [#allocation4], 1
    %17 = vsyncpa %s16, 0
    loop: start=0, step=1, limit=4
    $region2: #{tpu_custom_call.1} parent=1 // loop_pre_header
      _
    $region3: #{tpu_custom_call.1} parent=1 // loop_header
      %s19 = sphi 0, %s23
      %p20 = scmp.ge.s32.totalorder %s19, 4
      %s26 = sphi 0, %s38
      %s27 = sphi 0, %s34
      %s28 = sphi 0, %s26
      %s29 = sphi 0, %s27
      %s30 = sphi 0, %s28
      %s31 = sphi 0, %s29
      %s43 = sphi 0, %s45
      %s46 = sphi 0, %s43
      %s47 = sphi 0, %s46
      %s63 = sphi 0, %s47
      %s71 = sphi 0, %s73
      %s74 = sphi 0, %s71
      %s75 = sphi 0, %s74
      %s91 = sphi 0, %s75
      %s99 = sphi 0, %s101
      %s102 = sphi 0, %s99
      %s103 = sphi 0, %s102
      %s119 = sphi 0, %s103
      %s127 = sphi 0, %s129
      %s130 = sphi 0, %s127
      %s131 = sphi 0, %s130
      %s147 = sphi 0, %s131
      %s153 = sphi 0, %s155
      %s156 = sphi 0, %s153
      %s157 = sphi 0, %s156
      %s173 = sphi 0, %s157
    $region4: #{tpu_custom_call.1} parent=1 // loop_header_branch
      %22 = sbr.rel (%p20) target = $region8
    $region5: #{tpu_custom_call.1} parent=1 // loop_body
      %s24 = ssub.s32 %s19, 1
      %s25 = ssub.s32 %s19, 2
      %s32 = sadd.s32 1, %s27
      %p33 = scmp.ge.s32.totalorder %s32, 1
      %s34 = scalar_select %p33, 0, %s32
      %s35 = sadd.s32 1, %s26
      %s36 = scalar_select %p33, %s35, %s26
      %p37 = scmp.ge.s32.totalorder %s36, 2
      %s38 = scalar_select %p37, 0, %s36
      %s39 = sadd.s32 %s26, %s27
      %s40 = sadd.s32 %s38, %s34
      %s41 = ssub.s32 %s39, %s40
      %p42 = scmp.eq.s32.totalorder %s41, 0
      %s44 = sadd.s32 %s43, 1
      %s45 = scalar_select %p42, %s43, %s44
      %p48 = pneg %p42
      %p49 = scmp.eq.s32.totalorder %s19, 1
      %p50 = por %p48, %p49
      %p51 = scmp.ne.s32.totalorder %s43, %s46
      %p52 = scmp.eq.s32.totalorder %s19, 0
      %p53 = por %p51, %p52
      %p54 = scmp.ne.s32.totalorder %s43, %s46
      %p55 = scmp.eq.s32.totalorder %s24, 1
      %p56 = por %p54, %p55
      %p57 = scmp.ne.s32.totalorder %s46, %s47
      %p58 = scmp.eq.s32.totalorder %s24, 0
      %p59 = por %p57, %p58
      %p60 = scmp.ne.s32.totalorder %s46, %s47
      %p61 = scmp.eq.s32.totalorder %s25, 1
      %p62 = por %p60, %p61
      %p64 = scmp.ne.s32.totalorder %s47, %s63
      %p65 = scmp.eq.s32.totalorder %s25, 0
      %p66 = por %p64, %p65
      %s67 = sadd.s32 %s26, %s27
      %s68 = sadd.s32 %s38, %s34
      %s69 = ssub.s32 %s67, %s68
      %p70 = scmp.eq.s32.totalorder %s69, 0
      %s72 = sadd.s32 %s71, 1
      %s73 = scalar_select %p70, %s71, %s72
      %p76 = pneg %p70
      %p77 = scmp.eq.s32.totalorder %s19, 1
      %p78 = por %p76, %p77
      %p79 = scmp.ne.s32.totalorder %s71, %s74
      %p80 = scmp.eq.s32.totalorder %s19, 0
      %p81 = por %p79, %p80
      %p82 = scmp.ne.s32.totalorder %s71, %s74
      %p83 = scmp.eq.s32.totalorder %s24, 1
      %p84 = por %p82, %p83
      %p85 = scmp.ne.s32.totalorder %s74, %s75
      %p86 = scmp.eq.s32.totalorder %s24, 0
      %p87 = por %p85, %p86
      %p88 = scmp.ne.s32.totalorder %s74, %s75
      %p89 = scmp.eq.s32.totalorder %s25, 1
      %p90 = por %p88, %p89
      %p92 = scmp.ne.s32.totalorder %s75, %s91
      %p93 = scmp.eq.s32.totalorder %s25, 0
      %p94 = por %p92, %p93
      %s95 = sadd.s32 %s26, %s27
      %s96 = sadd.s32 %s38, %s34
      %s97 = ssub.s32 %s95, %s96
      %p98 = scmp.eq.s32.totalorder %s97, 0
      %s100 = sadd.s32 %s99, 1
      %s101 = scalar_select %p98, %s99, %s100
      %p104 = pneg %p98
      %p105 = scmp.eq.s32.totalorder %s19, 1
      %p106 = por %p104, %p105
      %p107 = scmp.ne.s32.totalorder %s99, %s102
      %p108 = scmp.eq.s32.totalorder %s19, 0
      %p109 = por %p107, %p108
      %p110 = scmp.ne.s32.totalorder %s99, %s102
      %p111 = scmp.eq.s32.totalorder %s24, 1
      %p112 = por %p110, %p111
      %p113 = scmp.ne.s32.totalorder %s102, %s103
      %p114 = scmp.eq.s32.totalorder %s24, 0
      %p115 = por %p113, %p114
      %p116 = scmp.ne.s32.totalorder %s102, %s103
      %p117 = scmp.eq.s32.totalorder %s25, 1
      %p118 = por %p116, %p117
      %p120 = scmp.ne.s32.totalorder %s103, %s119
      %p121 = scmp.eq.s32.totalorder %s25, 0
      %p122 = por %p120, %p121
      %s123 = sadd.s32 %s26, %s27
      %s124 = sadd.s32 %s38, %s34
      %s125 = ssub.s32 %s123, %s124
      %p126 = scmp.eq.s32.totalorder %s125, 0
      %s128 = sadd.s32 %s127, 1
      %s129 = scalar_select %p126, %s127, %s128
      %p132 = pneg %p126
      %p133 = scmp.eq.s32.totalorder %s19, 1
      %p134 = por %p132, %p133
      %p135 = scmp.ne.s32.totalorder %s127, %s130
      %p136 = scmp.eq.s32.totalorder %s19, 0
      %p137 = por %p135, %p136
      %p138 = scmp.ne.s32.totalorder %s127, %s130
      %p139 = scmp.eq.s32.totalorder %s24, 1
      %p140 = por %p138, %p139
      %p141 = scmp.ne.s32.totalorder %s130, %s131
      %p142 = scmp.eq.s32.totalorder %s24, 0
      %p143 = por %p141, %p142
      %p144 = scmp.ne.s32.totalorder %s130, %s131
      %p145 = scmp.eq.s32.totalorder %s25, 1
      %p146 = por %p144, %p145
      %p148 = scmp.ne.s32.totalorder %s131, %s147
      %p149 = scmp.eq.s32.totalorder %s25, 0
      %p150 = por %p148, %p149
      %s151 = ssub.s32 %s26, %s38
      %p152 = scmp.eq.s32.totalorder %s151, 0
      %s154 = sadd.s32 %s153, 1
      %s155 = scalar_select %p152, %s153, %s154
      %p158 = pneg %p152
      %p159 = scmp.eq.s32.totalorder %s19, 1
      %p160 = por %p158, %p159
      %p161 = scmp.ne.s32.totalorder %s153, %s156
      %p162 = scmp.eq.s32.totalorder %s19, 0
      %p163 = por %p161, %p162
      %p164 = scmp.ne.s32.totalorder %s153, %s156
      %p165 = scmp.eq.s32.totalorder %s24, 1
      %p166 = por %p164, %p165
      %p167 = scmp.ne.s32.totalorder %s156, %s157
      %p168 = scmp.eq.s32.totalorder %s24, 0
      %p169 = por %p167, %p168
      %p170 = scmp.ne.s32.totalorder %s156, %s157
      %p171 = scmp.eq.s32.totalorder %s25, 1
      %p172 = por %p170, %p171
      %p174 = scmp.ne.s32.totalorder %s157, %s173
      %p175 = scmp.eq.s32.totalorder %s25, 0
      %p176 = por %p174, %p175
      %p177 = scmp.le.s32.totalorder 1, %s19
      %p178 = scmp.lt.s32.totalorder %s19, 3
      %p179 = pnand %p177, %p178
      %p180 = pneg %p179
      // Predicated region
      $region9: #{tpu_custom_call.1} parent=5 // pred_check
        _
      $region10: #{tpu_custom_call.1} parent=5 // pred_check_branch
        %182 = sbr.rel (%p179) target = $region12
      $region11: #{tpu_custom_call.1} parent=5 // pred_region
        %s183 = ssub.s32 %s19, 1
      $region12: #{tpu_custom_call.1} parent=5 // pred_fallthru
        _
      %p184 = scmp.lt.s32.totalorder %s19, 2
      // Predicated region
      $region13: #{tpu_custom_call.1} parent=5 // pred_check
        %p185 = pneg %p184
      $region14: #{tpu_custom_call.1} parent=5 // pred_check_branch
        %187 = sbr.rel (%p185) target = $region16
      $region15: #{tpu_custom_call.1} parent=5 // pred_region
        // Predicated region
        $region17: #{tpu_custom_call.1} parent=15 // pred_check
          %p188 = pneg %p53
        $region18: #{tpu_custom_call.1} parent=15 // pred_check_branch
          %190 = sbr.rel (%p188) target = $region20
        $region19: #{tpu_custom_call.1} parent=15 // pred_region
          %s191 = sand.u32 %s43, 1
          %s192 = scalar_lea.sflag [#allocation3], %s191
          %s193 = sand.u32 %s43, 1
          %s194 = scalar_lea.vmem [#allocation2], %s193
          %s195 = sadd.s32 %s26, %s27
          %s197 = ssub.s32 16, 16
          %198 = vsyncadd %s192, %s197
          %s199 = smul.addr %s195, 16
          %s200 = scalar_lea.hbm %s0, %s199
          %s202 = sshll.u32 %s194, 4
          %s203 = int_to_ptr.vmem [resolvable:$true] %s202
          %205 = dma.hbm_to_vmem [thread:$0]  %s200, 16, %s203, %s192
        $region20: #{tpu_custom_call.1} parent=15 // pred_fallthru
          _
        // Predicated region
        $region21: #{tpu_custom_call.1} parent=15 // pred_check
          %p206 = pneg %p81
        $region22: #{tpu_custom_call.1} parent=15 // pred_check_branch
          %208 = sbr.rel (%p206) target = $region24
        $region23: #{tpu_custom_call.1} parent=15 // pred_region
          %s209 = sadd.s32 %s26, %s27
          %p210 = scmp.lt.s32.totalorder %s209, 1
          %s211 = scalar_select %p210, %s209, 1
          %s212 = scalar_lea.vmem %s1, %s211
          %s213 = sadd.s32 %s26, %s27
        $region24: #{tpu_custom_call.1} parent=15 // pred_fallthru
          _
        // Predicated region
        $region25: #{tpu_custom_call.1} parent=15 // pred_check
          %p214 = pneg %p109
        $region26: #{tpu_custom_call.1} parent=15 // pred_check_branch
          %216 = sbr.rel (%p214) target = $region28
        $region27: #{tpu_custom_call.1} parent=15 // pred_region
          %s217 = sand.u32 %s99, 1
          %s218 = scalar_lea.sflag [#allocation6], %s217
          %s219 = sand.u32 %s99, 1
          %s220 = smul.addr %s219, 4
          %s221 = scalar_lea.vmem [#allocation5], %s220
          %s222 = sadd.s32 %s26, %s27
          %s224 = ssub.s32 64, 64
          %225 = vsyncadd %s218, %s224
          %s226 = smul.addr %s222, 64
          %s227 = scalar_lea.hbm %s2, %s226
          %s229 = sshll.u32 %s221, 4
          %s230 = int_to_ptr.vmem [resolvable:$true] %s229
          %232 = dma.hbm_to_vmem [thread:$0]  %s227, 64, %s230, %s218
        $region28: #{tpu_custom_call.1} parent=15 // pred_fallthru
          _
        // Predicated region
        $region29: #{tpu_custom_call.1} parent=15 // pred_check
          %p233 = pneg %p137
        $region30: #{tpu_custom_call.1} parent=15 // pred_check_branch
          %235 = sbr.rel (%p233) target = $region32
        $region31: #{tpu_custom_call.1} parent=15 // pred_region
          %s236 = sadd.s32 %s26, %s27
          %p237 = scmp.lt.s32.totalorder %s236, 1
          %s238 = scalar_select %p237, %s236, 1
          %s239 = smul.addr %s238, 4
          %s240 = scalar_lea.vmem %s3, %s239
          %s241 = sadd.s32 %s26, %s27
        $region32: #{tpu_custom_call.1} parent=15 // pred_fallthru
          _
      $region16: #{tpu_custom_call.1} parent=5 // pred_fallthru
        _
      %p242 = scmp.le.s32.totalorder 1, %s19
      %p243 = scmp.lt.s32.totalorder %s19, 3
      %p244 = pnand %p242, %p243
      %p245 = pneg %p244
      // Predicated region
      $region33: #{tpu_custom_call.1} parent=5 // pred_check
        _
      $region34: #{tpu_custom_call.1} parent=5 // pred_check_branch
        %247 = sbr.rel (%p244) target = $region36
      $region35: #{tpu_custom_call.1} parent=5 // pred_region
        %s248 = ssub.s32 %s19, 1
        %s249 = sand.u32 %s46, 1
        %s250 = scalar_lea.sflag [#allocation3], %s249
        %s251 = sand.u32 %s46, 1
        %s252 = scalar_lea.vmem [#allocation2], %s251
        // Predicated region
        $region37: #{tpu_custom_call.1} parent=35 // pred_check
          %p253 = pneg %p59
        $region38: #{tpu_custom_call.1} parent=35 // pred_check_branch
          %255 = sbr.rel (%p253) target = $region40
        $region39: #{tpu_custom_call.1} parent=35 // pred_region
          %256 = dma.done %s250, 16
        $region40: #{tpu_custom_call.1} parent=35 // pred_fallthru
          _
        %s257 = sand.u32 %s102, 1
        %s258 = scalar_lea.sflag [#allocation6], %s257
        %s259 = sand.u32 %s102, 1
        %s260 = smul.addr %s259, 4
        %s261 = scalar_lea.vmem [#allocation5], %s260
        // Predicated region
        $region41: #{tpu_custom_call.1} parent=35 // pred_check
          %p262 = pneg %p115
        $region42: #{tpu_custom_call.1} parent=35 // pred_check_branch
          %264 = sbr.rel (%p262) target = $region44
        $region43: #{tpu_custom_call.1} parent=35 // pred_region
          %265 = dma.done %s258, 64
        $region44: #{tpu_custom_call.1} parent=35 // pred_fallthru
          _
        %s266 = sand.u32 %s46, 1
        %s267 = scalar_lea.sflag [#allocation3], %s266
        %s268 = sand.u32 %s46, 1
        %s269 = scalar_lea.vmem [#allocation2], %s268
        %p270 = pneg %p59
        %p271 = pneg %p56
        %s272 = sadd.s32 %s28, %s29
        %p273 = scmp.lt.s32.totalorder %s272, 1
        %s274 = scalar_select %p273, %s272, 1
        %s275 = scalar_lea.vmem %s1, %s274
        %p276 = pneg %p87
        %p277 = pneg %p84
        %s278 = sand.u32 %s102, 1
        %s279 = scalar_lea.sflag [#allocation6], %s278
        %s280 = sand.u32 %s102, 1
        %s281 = smul.addr %s280, 4
        %s282 = scalar_lea.vmem [#allocation5], %s281
        %p283 = pneg %p115
        %p284 = pneg %p112
        %s285 = sadd.s32 %s28, %s29
        %p286 = scmp.lt.s32.totalorder %s285, 1
        %s287 = scalar_select %p286, %s285, 1
        %s288 = smul.addr %s287, 4
        %s289 = scalar_lea.vmem %s3, %s288
        %p290 = pneg %p143
        %p291 = pneg %p140
        %p292 = pneg %p169
        %p293 = pneg %p166
        %s294 = sand.u32 %s156, 1
        %s295 = scalar_lea.sflag [#allocation4], %s294
        %s296 = sand.u32 %s156, 1
        %s297 = smul.addr %s296, 8
        %s298 = scalar_lea.vmem [#allocation7], %s297
        %s299 = sadd.s32 %s28, %s29
        %s300 = sadd.s32 %s28, %s29
        %p301 = scmp.lt.s32.totalorder %s300, 1
        %s302 = scalar_select %p301, %s300, 1
        %s303 = scalar_lea.vmem %s1, %s302
        %s304 = sadd.s32 %s28, %s29
        %s305 = sadd.s32 %s28, %s29
        %s306 = sadd.s32 %s28, %s29
        %p307 = scmp.lt.s32.totalorder %s306, 1
        %s308 = scalar_select %p307, %s306, 1
        %s309 = smul.addr %s308, 4
        %s310 = scalar_lea.vmem %s3, %s309
        %s311 = sadd.s32 %s28, %s29
        %p312 = scmp.eq.s32.totalorder %s29, 0
        // Predicated region
        $region45: #{tpu_custom_call.1} parent=35 // pred_check
          %p313 = pneg %p312
        $region46: #{tpu_custom_call.1} parent=35 // pred_check_branch
          %315 = sbr.rel (%p313) target = $region48
        $region47: #{tpu_custom_call.1} parent=35 // pred_region
          %316 = vst [vmem:[%s298] sm:$0xff] 0.0
        $region48: #{tpu_custom_call.1} parent=35 // pred_fallthru
          _
        %v317 = vld [vmem:[%s303] sm:$0x1]
        %v318 = vld [vmem:[%s261] sm:$0xf]
        %v319 = vld [vmem:[%s310] sm:$0xf]
        %v320 = vsub.f32 %v318, %v319
        %v321 = vand.u32 2147483647, %v320
        %vm322 = vcmp.lt.f32.partialorder %v321, 1.0
        %v323 = vmul.f32 %v320, 0.5
        %v324 = vmul.f32 %v323, %v320
        %v325 = vsub.f32 %v321, 0.5
        %v326 = vsel %vm322, %v324, %v325
        %v328 = vlaneseq
        %v329 = vshrl.u32 %v328, 7
        %v330 = vsub.s32 0, %v329
        %v331 = vrot.slane %v317, %v330
        %v333 = vmul.f32 %v331, %v326
        %vm334 = vcmask 1043456
        %v335 = vsel %vm334, %v333, 0.0
        %336 = vadd.xlane.f32.xlu0 %v335
        %v337 = vpop.xlane.xlu0 %336
        %v338 = vrot.slane %v337, 4
        %v339 = vadd.f32 %v337, %v338
        %v340 = vrot.slane %v339, 2
        %v341 = vadd.f32 %v339, %v340
        %v342 = vrot.slane %v341, 1
        %v343 = vadd.f32 %v341, %v342
        %s344 = vtos %v343
        %vm345 = vcmp.gt.f32.partialorder %v317, 0.5
        %v346 = vld [vmem:[%s252] sm:$0x1]
        %v347 = vsub.f32 1.0, %v346
        %v348 = vsel %vm345, %v346, %v347
        %v349 = vlog2.pop %v348
        %v350 = vmul.f32 %v349, 0.6931472
        %v351 = vmax.f32 %v350, -100.0
        %vm352 = vcmask 1040384
        %v353 = vsel %vm352, %v351, 0.0
        %354 = vadd.xlane.f32.xlu0 %v353
        %v355 = vpop.xlane.xlu0 %354
        %v356 = vrot.slane %v355, 4
        %v357 = vadd.f32 %v355, %v356
        %v358 = vrot.slane %v357, 2
        %v359 = vadd.f32 %v357, %v358
        %v360 = vrot.slane %v359, 1
        %v361 = vadd.f32 %v359, %v360
        %s362 = vtos %v361
        %s363 = ssub.f32 0.0, %s362
        %v364 = vld [vmem:[%s298] sm:$0xff]
        %s365 = smul.f32 %s344, 10.0
        %s366 = sadd.f32 %s365, %s363
        %v367 = vstv %s366
        %v368 = vadd.f32 %v364, %v367
        %369 = vst [vmem:[%s298] sm:$0xff] %v368
        %s370 = sand.u32 %s156, 1
        %s371 = scalar_lea.sflag [#allocation4], %s370
        %s372 = sand.u32 %s156, 1
        %s373 = smul.addr %s372, 8
        %s374 = scalar_lea.vmem [#allocation7], %s373
        // Predicated region
        $region49: #{tpu_custom_call.1} parent=35 // pred_check
          %p375 = pneg %p166
        $region50: #{tpu_custom_call.1} parent=35 // pred_check_branch
          %377 = sbr.rel (%p375) target = $region52
        $region51: #{tpu_custom_call.1} parent=35 // pred_region
          %s379 = ssub.s32 128, 128
          %380 = vsyncadd %s371, %s379
          %s381 = smul.addr %s28, 128
          %s382 = scalar_lea.hbm %s4, %s381
          %s384 = sshll.u32 %s374, 4
          %s385 = int_to_ptr.vmem [resolvable:$true] %s384
          %387 = dma.vmem_to_hbm [thread:$0]  %s385, 128, %s382, %s371
        $region52: #{tpu_custom_call.1} parent=35 // pred_fallthru
          _
      $region36: #{tpu_custom_call.1} parent=5 // pred_fallthru
        _
      %p388 = scmp.le.s32.totalorder 2, %s19
      // Predicated region
      $region53: #{tpu_custom_call.1} parent=5 // pred_check
        %p389 = pneg %p388
      $region54: #{tpu_custom_call.1} parent=5 // pred_check_branch
        %391 = sbr.rel (%p389) target = $region56
      $region55: #{tpu_custom_call.1} parent=5 // pred_region
        %s392 = ssub.s32 %s19, 2
        // Predicated region
        $region57: #{tpu_custom_call.1} parent=55 // pred_check
          %p393 = pneg %p172
        $region58: #{tpu_custom_call.1} parent=55 // pred_check_branch
          %395 = sbr.rel (%p393) target = $region60
        $region59: #{tpu_custom_call.1} parent=55 // pred_region
          %s396 = sand.u32 %s157, 1
          %s397 = scalar_lea.sflag [#allocation4], %s396
          %s398 = sand.u32 %s157, 1
          %s399 = smul.addr %s398, 8
          %s400 = scalar_lea.vmem [#allocation7], %s399
          %401 = dma.done %s397, 128
        $region60: #{tpu_custom_call.1} parent=55 // pred_fallthru
          _
      $region56: #{tpu_custom_call.1} parent=5 // pred_fallthru
        _
    $region6: #{tpu_custom_call.1} parent=1 // loop_footer
      %s23 = sadd.s32 1, %s19
    $region7: #{tpu_custom_call.1} parent=1 // loop_footer_branch
      %18 = sbr.rel target = $region3
    $region8: #{tpu_custom_call.1} parent=1 // loop_exit
      _
    %402 = vsyncpa [#allocation3], 1
    %s403 = scalar_lea.sflag [#allocation3], 1
    %404 = vsyncpa %s403, 1
    %405 = vsyncpa [#allocation6], 1
    %s406 = scalar_lea.sflag [#allocation6], 1
    %407 = vsyncpa %s406, 1
    %408 = vsyncpa [#allocation4], 1
    %s409 = scalar_lea.sflag [#allocation4], 1
    %410 = vsyncpa %s409, 1

</llo_original>
